<compile_context>
chip_gen: v7x
topology: tpu7x:2x2x1
jax: 0.10.0
libtpu: 0.0.40
codegen_flags: <defaults>
</compile_context>

<pallas_src>
import functools

import jax
import jax.numpy as jnp
from jax.experimental import pallas as pl
from jax.experimental.pallas import tpu as pltpu


def _round_up(x, m):
    return ((x + m - 1) // m) * m


def navmodel_mlp_kernel(x_ref, w1_ref, b1_ref, w2_ref, b2_ref, w3_ref, b3_ref, o_ref):
    """Fused 3-layer MLP: Linear->ReLU->Linear->ReLU->Linear (Q-value head).

    Matmuls run on the MXU in the weights' dtype (bf16 by default) with f32
    accumulation (preferred_element_type); bias-add / ReLU / output stay f32.
    """
    cdt = w1_ref.dtype
    x = x_ref[...]
    h1 = jnp.dot(x, w1_ref[...], preferred_element_type=jnp.float32) + b1_ref[...]
    h1 = jnp.maximum(h1, 0.0).astype(cdt)
    h2 = jnp.dot(h1, w2_ref[...], preferred_element_type=jnp.float32) + b2_ref[...]
    h2 = jnp.maximum(h2, 0.0).astype(cdt)
    q = jnp.dot(h2, w3_ref[...], preferred_element_type=jnp.float32) + b3_ref[...]
    o_ref[...] = q.astype(o_ref.dtype)


@functools.partial(jax.jit, static_argnames=("batch_tile", "compute_dtype"))
def navmodel_forward(x, params, batch_tile=512, compute_dtype=jnp.bfloat16):
    """NavModel.forward: FCNet with hidden sizes [fc1_units, fc2_units].

    x:        (B, state_size) float32
    params:   dict of w1 (S,F1), b1 (1,F1), w2 (F1,F2), b2 (1,F2),
                      w3 (F2,A),  b3 (1,A)
    returns:  (B, action_size) float32 Q-values (no final activation).
    """
    w1, b1 = params["w1"], params["b1"]
    w2, b2 = params["w2"], params["b2"]
    w3, b3 = params["w3"], params["b3"]

    B, S = x.shape
    F1 = w1.shape[1]
    F2 = w2.shape[1]
    A = w3.shape[1]

    # Lane-dense output: pad the (tiny) action dim up to a full 128-lane vreg so
    # stores are unmasked `vst` instead of per-row `vst.msk`; slice back after.
    A_pad = _round_up(A, 128)
    if A_pad != A:
        w3 = jnp.pad(w3, ((0, 0), (0, A_pad - A)))
        b3 = jnp.pad(b3, ((0, 0), (0, A_pad - A)))

    # bf16 inputs/weights hit the full-rate MXU path on v6e/v7x (and halve
    # DMA/VMEM bytes on all generations); accumulation stays f32 in-kernel.
    x_c = x.astype(compute_dtype)
    w1c, w2c, w3c = (w.astype(compute_dtype) for w in (w1, w2, w3))
    b1f, b2f, b3f = (b.astype(jnp.float32) for b in (b1, b2, b3))

    # Batch tile: as large as practical (whole weight set is ~150 KB, so VMEM is
    # never the limit), multiple of 8 sublanes (256-multiples fill the v6e/v7x
    # MXU), and >=2 grid steps for large batches so v7x's 2 TensorCores both
    # get work via the "parallel" grid axis.
    batch_tile = max(8, _round_up(batch_tile, 8))
    if B > batch_tile:
        tb = batch_tile
    else:
        tb = B  # single block covering the full batch (full-dim block is always legal)
        if B >= 512:
            half = _round_up((B + 1) // 2, 256)
            if half < B:
                tb = half
    grid = (pl.cdiv(B, tb),)

    flops = 2 * B * (S * F1 + F1 * F2 + F2 * A_pad)
    bytes_accessed = (
        x_c.size * x_c.dtype.itemsize
        + sum(a.size * a.dtype.itemsize for a in (w1c, w2c, w3c, b1f, b2f, b3f))
        + B * A_pad * 4
    )

    out = pl.pallas_call(
        navmodel_mlp_kernel,
        out_shape=jax.ShapeDtypeStruct((B, A_pad), jnp.float32),
        grid_spec=pltpu.PrefetchScalarGridSpec(
            num_scalar_prefetch=0,
            grid=grid,
            in_specs=[
                pl.BlockSpec((tb, S), lambda i: (i, 0)),
                # Weights/biases are grid-invariant (constant block index):
                # Pallas DMAs them once and elides the revisited copies, so they
                # stay VMEM-resident across all batch tiles.
                pl.BlockSpec((S, F1), lambda i: (0, 0)),
                pl.BlockSpec((1, F1), lambda i: (0, 0)),
                pl.BlockSpec((F1, F2), lambda i: (0, 0)),
                pl.BlockSpec((1, F2), lambda i: (0, 0)),
                pl.BlockSpec((F2, A_pad), lambda i: (0, 0)),
                pl.BlockSpec((1, A_pad), lambda i: (0, 0)),
            ],
            out_specs=pl.BlockSpec((tb, A_pad), lambda i: (i, 0)),
        ),
        compiler_params=pltpu.CompilerParams(
            dimension_semantics=("parallel",),
        ),
        cost_estimate=pl.CostEstimate(
            flops=flops, transcendentals=0, bytes_accessed=bytes_accessed
        ),
    )(x_c, w1c, b1f, w2c, b2f, w3c, b3f)

    return out[:, :A]


def init_navmodel_params(key, state_size, action_size, fc1_units=256, fc2_units=128):
    """Deterministic init mimicking torch.nn.Linear default (U[-1/sqrt(fan_in), +1/sqrt(fan_in)])."""
    dims = [(state_size, fc1_units), (fc1_units, fc2_units), (fc2_units, action_size)]
    params = {}
    for idx, (fan_in, fan_out) in enumerate(dims, start=1):
        key, kw, kb = jax.random.split(key, 3)
        bound = 1.0 / jnp.sqrt(jnp.float32(fan_in))
        params[f"w{idx}"] = jax.random.uniform(
            kw, (fan_in, fan_out), jnp.float32, minval=-bound, maxval=bound
        )
        params[f"b{idx}"] = jax.random.uniform(
            kb, (1, fan_out), jnp.float32, minval=-bound, maxval=bound
        )
    return params


def navmodel_forward_ref(x, params):
    """Pure-JAX f32 reference of the same forward pass."""
    h1 = jnp.maximum(x @ params["w1"] + params["b1"], 0.0)
    h2 = jnp.maximum(h1 @ params["w2"] + params["b2"], 0.0)
    return h2 @ params["w3"] + params["b3"]


if __name__ == "__main__":
    STATE_SIZE = 16
    ACTION_SIZE = 8
    FC1_UNITS = 256
    FC2_UNITS = 128

    key = jax.random.PRNGKey(0)
    key, kx_small, kx_big = jax.random.split(key, 3)
    params = init_navmodel_params(key, STATE_SIZE, ACTION_SIZE, FC1_UNITS, FC2_UNITS)

    # 1) Tiny-batch check in full f32 (tight tolerance). NOTE: at B=8 a single
    #    MLP call is pure launch/DMA latency; in a real RL loop batch states
    #    before calling (the kernel is tuned for the large-batch path below).
    x_small = jax.random.normal(kx_small, (8, STATE_SIZE), dtype=jnp.float32)
    q_small = jax.block_until_ready(
        navmodel_forward(x_small, params, compute_dtype=jnp.float32)
    )
    q_small_ref = navmodel_forward_ref(x_small, params)
    assert q_small.shape == (8, ACTION_SIZE), q_small.shape
    assert jnp.allclose(q_small, q_small_ref, atol=1e-5, rtol=1e-5), "f32 mismatch vs JAX reference"

    # 2) Larger, non-divisible batch exercising the multi-step tiled grid,
    #    partial-block masking, and the default bf16 MXU path.
    x_big = jax.random.normal(kx_big, (640, STATE_SIZE), dtype=jnp.float32)
    q_big = jax.block_until_ready(navmodel_forward(x_big, params))
    q_big_ref = navmodel_forward_ref(x_big, params)
    assert q_big.shape == (640, ACTION_SIZE), q_big.shape
    assert jnp.allclose(q_big, q_big_ref, atol=3e-2, rtol=3e-2), "bf16 mismatch vs JAX reference"

    print("KERNEL_OK")
</pallas_src>

<mosaic_0001>
module attributes {stable_mosaic.version = 11 : i64} {
  func.func @navmodel_mlp_kernel(%arg0: i32, %arg1: memref<8x16xf32, #tpu.memory_space<vmem>>, %arg2: memref<16x256xf32, #tpu.memory_space<vmem>>, %arg3: memref<1x256xf32, #tpu.memory_space<vmem>>, %arg4: memref<256x128xf32, #tpu.memory_space<vmem>>, %arg5: memref<1x128xf32, #tpu.memory_space<vmem>>, %arg6: memref<128x128xf32, #tpu.memory_space<vmem>>, %arg7: memref<1x128xf32, #tpu.memory_space<vmem>>, %arg8: memref<8x128xf32, #tpu.memory_space<vmem>>) attributes {dimension_semantics = [#tpu.dimension_semantics<parallel>], iteration_bounds = array<i64: 1>, scalar_prefetch = 0 : i64, scratch_operands = 0 : i64, tpu.core_type = #tpu.core_type<tc>, window_params = [{transform_indices = @transform_0, window_bounds = array<i64: 8, 16>}, {pipeline_mode = #tpu.pipeline_mode<synchronous>, transform_indices = @transform_1, window_bounds = array<i64: 16, 256>}, {pipeline_mode = #tpu.pipeline_mode<synchronous>, transform_indices = @transform_2, window_bounds = array<i64: 1, 256>}, {pipeline_mode = #tpu.pipeline_mode<synchronous>, transform_indices = @transform_3, window_bounds = array<i64: 256, 128>}, {pipeline_mode = #tpu.pipeline_mode<synchronous>, transform_indices = @transform_4, window_bounds = array<i64: 1, 128>}, {pipeline_mode = #tpu.pipeline_mode<synchronous>, transform_indices = @transform_5, window_bounds = array<i64: 128, 128>}, {pipeline_mode = #tpu.pipeline_mode<synchronous>, transform_indices = @transform_6, window_bounds = array<i64: 1, 128>}, {transform_indices = @transform_7, window_bounds = array<i64: 8, 128>}]} {
    %c0 = arith.constant 0 : index
    %c0_0 = arith.constant 0 : index
    %0 = vector.load %arg1[%c0, %c0_0] : memref<8x16xf32, #tpu.memory_space<vmem>>, vector<8x16xf32>
    %c0_1 = arith.constant 0 : index
    %c0_2 = arith.constant 0 : index
    %1 = vector.load %arg2[%c0_1, %c0_2] : memref<16x256xf32, #tpu.memory_space<vmem>>, vector<16x256xf32>
    %cst = arith.constant dense<0.000000e+00> : vector<8x256xf32>
    %2 = tpu.matmul %0, %1, %cst {dimension_numbers = #tpu.dot_dimension_numbers<[1], [0], [0], [1], [0, 0, 1, 1], [], []>} : vector<8x16xf32>, vector<16x256xf32>, vector<8x256xf32> -> vector<8x256xf32>
    %c0_3 = arith.constant 0 : index
    %c0_4 = arith.constant 0 : index
    %3 = vector.load %arg3[%c0_3, %c0_4] : memref<1x256xf32, #tpu.memory_space<vmem>>, vector<1x256xf32>
    %4 = vector.broadcast %3 : vector<1x256xf32> to vector<8x256xf32>
    %5 = arith.addf %2, %4 : vector<8x256xf32>
    %cst_5 = arith.constant 0.000000e+00 : f32
    %6 = vector.broadcast %cst_5 : f32 to vector<8x256xf32>
    %7 = arith.maximumf %5, %6 : vector<8x256xf32>
    %c0_6 = arith.constant 0 : index
    %c0_7 = arith.constant 0 : index
    %8 = vector.load %arg4[%c0_6, %c0_7] : memref<256x128xf32, #tpu.memory_space<vmem>>, vector<256x128xf32>
    %cst_8 = arith.constant dense<0.000000e+00> : vector<8x128xf32>
    %9 = tpu.matmul %7, %8, %cst_8 {dimension_numbers = #tpu.dot_dimension_numbers<[1], [0], [0], [1], [0, 0, 1, 1], [], []>} : vector<8x256xf32>, vector<256x128xf32>, vector<8x128xf32> -> vector<8x128xf32>
    %c0_9 = arith.constant 0 : index
    %c0_10 = arith.constant 0 : index
    %10 = vector.load %arg5[%c0_9, %c0_10] : memref<1x128xf32, #tpu.memory_space<vmem>>, vector<1x128xf32>
    %11 = vector.broadcast %10 : vector<1x128xf32> to vector<8x128xf32>
    %12 = arith.addf %9, %11 : vector<8x128xf32>
    %cst_11 = arith.constant 0.000000e+00 : f32
    %13 = vector.broadcast %cst_11 : f32 to vector<8x128xf32>
    %14 = arith.maximumf %12, %13 : vector<8x128xf32>
    %c0_12 = arith.constant 0 : index
    %c0_13 = arith.constant 0 : index
    %15 = vector.load %arg6[%c0_12, %c0_13] : memref<128x128xf32, #tpu.memory_space<vmem>>, vector<128x128xf32>
    %cst_14 = arith.constant dense<0.000000e+00> : vector<8x128xf32>
    %16 = tpu.matmul %14, %15, %cst_14 {dimension_numbers = #tpu.dot_dimension_numbers<[1], [0], [0], [1], [0, 0, 1, 1], [], []>} : vector<8x128xf32>, vector<128x128xf32>, vector<8x128xf32> -> vector<8x128xf32>
    %c0_15 = arith.constant 0 : index
    %c0_16 = arith.constant 0 : index
    %17 = vector.load %arg7[%c0_15, %c0_16] : memref<1x128xf32, #tpu.memory_space<vmem>>, vector<1x128xf32>
    %18 = vector.broadcast %17 : vector<1x128xf32> to vector<8x128xf32>
    %19 = arith.addf %16, %18 : vector<8x128xf32>
    %c0_17 = arith.constant 0 : index
    %c0_18 = arith.constant 0 : index
    %20 = vector.load %arg8[%c0_17, %c0_18] : memref<8x128xf32, #tpu.memory_space<vmem>>, vector<8x128xf32>
    tpu.vector_store %arg8[%c0_17, %c0_18], %19 {strides = array<i32>} : memref<8x128xf32, #tpu.memory_space<vmem>>, vector<8x128xf32>,
    return
  }
  func.func @transform_0(%arg0: i32) -> (i32, i32) {
    %c0_i32 = arith.constant 0 : i32
    %c0_i32_0 = arith.constant 0 : i32
    return %arg0, %c0_i32 : i32, i32
  }
  func.func @transform_1(%arg0: i32) -> (i32, i32) {
    %c0_i32 = arith.constant 0 : i32
    %c0_i32_0 = arith.constant 0 : i32
    %c0_i32_1 = arith.constant 0 : i32
    return %c0_i32, %c0_i32_0 : i32, i32
  }
  func.func @transform_2(%arg0: i32) -> (i32, i32) {
    %c0_i32 = arith.constant 0 : i32
    %c0_i32_0 = arith.constant 0 : i32
    %c0_i32_1 = arith.constant 0 : i32
    return %c0_i32, %c0_i32_0 : i32, i32
  }
  func.func @transform_3(%arg0: i32) -> (i32, i32) {
    %c0_i32 = arith.constant 0 : i32
    %c0_i32_0 = arith.constant 0 : i32
    %c0_i32_1 = arith.constant 0 : i32
    return %c0_i32, %c0_i32_0 : i32, i32
  }
  func.func @transform_4(%arg0: i32) -> (i32, i32) {
    %c0_i32 = arith.constant 0 : i32
    %c0_i32_0 = arith.constant 0 : i32
    %c0_i32_1 = arith.constant 0 : i32
    return %c0_i32, %c0_i32_0 : i32, i32
  }
  func.func @transform_5(%arg0: i32) -> (i32, i32) {
    %c0_i32 = arith.constant 0 : i32
    %c0_i32_0 = arith.constant 0 : i32
    %c0_i32_1 = arith.constant 0 : i32
    return %c0_i32, %c0_i32_0 : i32, i32
  }
  func.func @transform_6(%arg0: i32) -> (i32, i32) {
    %c0_i32 = arith.constant 0 : i32
    %c0_i32_0 = arith.constant 0 : i32
    %c0_i32_1 = arith.constant 0 : i32
    return %c0_i32, %c0_i32_0 : i32, i32
  }
  func.func @transform_7(%arg0: i32) -> (i32, i32) {
    %c0_i32 = arith.constant 0 : i32
    %c0_i32_0 = arith.constant 0 : i32
    return %arg0, %c0_i32 : i32, i32
  }
}

</mosaic_0001>

<llo_original>
// kernel: navmodel_forward.1
$region0: #{navmodel_forward.1}
  #allocation0 [shape = 'u32[]', space=smem, size = 0x4, offset = 0x4, fixed_abs, tag = 'smem constant byte address 0x4 - core index']
  #allocation1 [shape = 'u32[144,128]{1,0:T(1,128)}', space=vmem, size = 0x12000, scoped, tag = 'internal scratch']
  %s0 = inlined_call_operand.vmem [shape: f32[8,16], index: 0, kind: input, shape index: {}]
  %s1 = inlined_call_operand.vmem [shape: f32[16,256], index: 1, kind: input, shape index: {}]
  %s2 = inlined_call_operand.vmem [shape: f32[1,256], index: 2, kind: input, shape index: {}]
  %s3 = inlined_call_operand.vmem [shape: f32[256,128], index: 3, kind: input, shape index: {}]
  %s4 = inlined_call_operand.vmem [shape: f32[1,128], index: 4, kind: input, shape index: {}]
  %s5 = inlined_call_operand.vmem [shape: f32[128,128], index: 5, kind: input, shape index: {}]
  %s6 = inlined_call_operand.vmem [shape: f32[1,128], index: 6, kind: input, shape index: {}]
  %s7 = inlined_call_operand.hbm [shape: f32[8,128], index: 7, kind: output, shape index: {}]
  %s8 = sld [smem:[#allocation0]]
  $region38: #{navmodel_forward.1} parent=0
    _
  %s10 = ssub.s32 1, %s8
  %s11 = scalar_select 0, %s10, %s8
  $region1: #{navmodel_forward.1} parent=0
    #allocation2 [shape = 'u8[4096]{0}', space=vmem, size = 0x1000, scoped, tag = 'output window, operand 0, single buffered']
    #allocation3 [shape = 's32[1]{0}', space=sflag, size = 0x4, scoped, tag = 'scoped memory for navmodel_forward.1']
    %12 = vsyncpa [#allocation3], 0
    // Predicated region
    $region2: #{navmodel_forward.1} parent=1 // pred_check
      _
    $region3: #{navmodel_forward.1} parent=1 // pred_check_branch
      %14 = sbr.rel (0) target = $region5
    $region4: #{navmodel_forward.1} parent=1 // pred_region
      _
    $region5: #{navmodel_forward.1} parent=1 // pred_fallthru
      _
    // Predicated region
    $region6: #{navmodel_forward.1} parent=1 // pred_check
      _
    $region7: #{navmodel_forward.1} parent=1 // pred_check_branch
      %16 = sbr.rel (0) target = $region9
    $region8: #{navmodel_forward.1} parent=1 // pred_region
      _
    $region9: #{navmodel_forward.1} parent=1 // pred_fallthru
      _
    // Predicated region
    $region10: #{navmodel_forward.1} parent=1 // pred_check
      _
    $region11: #{navmodel_forward.1} parent=1 // pred_check_branch
      %18 = sbr.rel (0) target = $region13
    $region12: #{navmodel_forward.1} parent=1 // pred_region
      _
    $region13: #{navmodel_forward.1} parent=1 // pred_fallthru
      _
    // Predicated region
    $region14: #{navmodel_forward.1} parent=1 // pred_check
      _
    $region15: #{navmodel_forward.1} parent=1 // pred_check_branch
      %20 = sbr.rel (0) target = $region17
    $region16: #{navmodel_forward.1} parent=1 // pred_region
      _
    $region17: #{navmodel_forward.1} parent=1 // pred_fallthru
      _
    // Predicated region
    $region18: #{navmodel_forward.1} parent=1 // pred_check
      _
    $region19: #{navmodel_forward.1} parent=1 // pred_check_branch
      %22 = sbr.rel (0) target = $region21
    $region20: #{navmodel_forward.1} parent=1 // pred_region
      _
    $region21: #{navmodel_forward.1} parent=1 // pred_fallthru
      _
    // Predicated region
    $region22: #{navmodel_forward.1} parent=1 // pred_check
      _
    $region23: #{navmodel_forward.1} parent=1 // pred_check_branch
      %24 = sbr.rel (0) target = $region25
    $region24: #{navmodel_forward.1} parent=1 // pred_region
      _
    $region25: #{navmodel_forward.1} parent=1 // pred_fallthru
      _
    // Predicated region
    $region26: #{navmodel_forward.1} parent=1 // pred_check
      _
    $region27: #{navmodel_forward.1} parent=1 // pred_check_branch
      %26 = sbr.rel (0) target = $region29
    $region28: #{navmodel_forward.1} parent=1 // pred_region
      _
    $region29: #{navmodel_forward.1} parent=1 // pred_fallthru
      _
    %v27 = vld [vmem:[%s0] sm:$0xff]
    %v28 = vld [vmem:[%s1] sm:$0xff]
    %v29 = vld [vmem:[%s1 + $0x8] sm:$0xff]
    %v30 = vld [vmem:[%s1 + $0x10] sm:$0xff]
    %v31 = vld [vmem:[%s1 + $0x18] sm:$0xff]
    %v32 = vld [vmem:[%s2] sm:$0x3]
    %v34 = vlaneseq
    %v35 = vshrl.u32 %v34, 7
    %v36 = vsub.s32 0, %v35
    %v37 = vrot.slane %v32, %v36
    %v38 = vlaneseq
    %v39 = vshrl.u32 %v38, 7
    %v40 = vsub.s32 1, %v39
    %v41 = vrot.slane %v32, %v40
    %vm44 = vcmask 130048
    %v46 = vsel %vm44, %v27, 0
    %48 = vmatprep.subr.mxu0 %v29
    %49 = vmatpush1.msra.mxu0 %v28
    %50 = vmatprep.subr.mxu0 %v31
    %51 = vmatpush1.msra.mxu0 %v30
    %52 = vmatprep.subr.mxu0 0.0
    %53 = vmatpush1.msra.mxu0 0.0
    %54 = vmatprep.subr.mxu0 0.0
    %55 = vmatpush1.msra.mxu0 0.0
    %56 = vmatprep.subr.mxu0 0.0
    %57 = vmatpush1.msra.mxu0 0.0
    %58 = vmatprep.subr.mxu0 0.0
    %59 = vmatpush1.msra.mxu0 0.0
    %60 = vmatprep.subr.mxu0 0.0
    %61 = vmatpush1.msra.mxu0 0.0
    %62 = vmatprep.subr.mxu0 0.0
    %63 = vmatpush1.msra.mxu0 0.0
    %64 = vmatprep.subr.mxu0 0.0
    %65 = vmatpush1.msra.mxu0 0.0
    %66 = vmatprep.subr.mxu0 0.0
    %67 = vmatpush1.msra.mxu0 0.0
    %68 = vmatprep.subr.mxu0 0.0
    %69 = vmatpush1.msra.mxu0 0.0
    %70 = vmatprep.subr.mxu0 0.0
    %71 = vmatpush1.msra.mxu0 0.0
    %72 = vmatprep.subr.mxu0 0.0
    %73 = vmatpush1.msra.mxu0 0.0
    %74 = vmatprep.subr.mxu0 0.0
    %75 = vmatpush1.msra.mxu0 0.0
    %76 = vmatprep.subr.mxu0 0.0
    %77 = vmatpush1.msra.mxu0 0.0
    %78 = vmatprep.subr.mxu0 0.0
    %79 = vmatpush1.msra.mxu0 0.0
    %80 = vmatprep.subr.mxu0 0.0
    %81 = vmatpush1.msra.mxu0 0.0
    %82 = vmatprep.subr.mxu0 0.0
    %83 = vmatpush1.msra.mxu0 0.0
    %84 = vmatprep.subr.mxu0 0.0
    %85 = vmatpush1.msra.mxu0 0.0
    %86 = vmatprep.subr.mxu0 0.0
    %87 = vmatpush1.msra.mxu0 0.0
    %88 = vmatprep.subr.mxu0 0.0
    %89 = vmatpush1.msra.mxu0 0.0
    %90 = vmatprep.subr.mxu0 0.0
    %91 = vmatpush1.msra.mxu0 0.0
    %92 = vmatprep.subr.mxu0 0.0
    %93 = vmatpush1.msra.mxu0 0.0
    %94 = vmatprep.subr.mxu0 0.0
    %95 = vmatpush1.msra.mxu0 0.0
    %96 = vmatprep.subr.mxu0 0.0
    %97 = vmatpush1.msra.mxu0 0.0
    %98 = vmatprep.subr.mxu0 0.0
    %99 = vmatpush1.msra.mxu0 0.0
    %100 = vmatprep.subr.mxu0 0.0
    %101 = vmatpush1.msra.mxu0 0.0
    %102 = vmatprep.subr.mxu0 0.0
    %103 = vmatpush1.msra.mxu0 0.0
    %104 = vmatprep.subr.mxu0 0.0
    %105 = vmatpush1.msra.mxu0 0.0
    %106 = vmatprep.subr.mxu0 0.0
    %107 = vmatpush1.msra.mxu0 0.0
    %108 = vmatprep.subr.mxu0 0.0
    %109 = vmatpush1.msra.mxu0 0.0
    %110 = vmatprep.subr.mxu0 0.0
    %111 = vmatpush1.msra.mxu0 0.0
    %112 = vmatprep.mubr.f32.mxu0 0.0
    %113 = vmatmul.mubr.f32.gmra.mrb[0].mxu0 %v46
    %v114 = vpop.f32.mrb[0].mxu0
    %v115 = vadd.f32 %v37, %v114
    %v116 = vpop.f32.mrb[0].mxu0
    %v117 = vadd.f32 %v41, %v116
    %118 = vdwg.mxu0
    %v119 = vmax.f32 %v115, 0.0
    %v120 = vmax.f32 %v117, 0.0
    %v121 = vld [vmem:[%s3] sm:$0xff]
    %v122 = vld [vmem:[%s3 + $0x8] sm:$0xff]
    %v123 = vld [vmem:[%s3 + $0x10] sm:$0xff]
    %v124 = vld [vmem:[%s3 + $0x18] sm:$0xff]
    %v125 = vld [vmem:[%s3 + $0x20] sm:$0xff]
    %v126 = vld [vmem:[%s3 + $0x28] sm:$0xff]
    %v127 = vld [vmem:[%s3 + $0x30] sm:$0xff]
    %v128 = vld [vmem:[%s3 + $0x38] sm:$0xff]
    %v129 = vld [vmem:[%s3 + $0x40] sm:$0xff]
    %v130 = vld [vmem:[%s3 + $0x48] sm:$0xff]
    %v131 = vld [vmem:[%s3 + $0x50] sm:$0xff]
    %v132 = vld [vmem:[%s3 + $0x58] sm:$0xff]
    %v133 = vld [vmem:[%s3 + $0x60] sm:$0xff]
    %v134 = vld [vmem:[%s3 + $0x68] sm:$0xff]
    %v135 = vld [vmem:[%s3 + $0x70] sm:$0xff]
    %v136 = vld [vmem:[%s3 + $0x78] sm:$0xff]
    %v137 = vld [vmem:[%s3 + $0x80] sm:$0xff]
    %v138 = vld [vmem:[%s3 + $0x88] sm:$0xff]
    %v139 = vld [vmem:[%s3 + $0x90] sm:$0xff]
    %v140 = vld [vmem:[%s3 + $0x98] sm:$0xff]
    %v141 = vld [vmem:[%s3 + $0xa0] sm:$0xff]
    %v142 = vld [vmem:[%s3 + $0xa8] sm:$0xff]
    %v143 = vld [vmem:[%s3 + $0xb0] sm:$0xff]
    %v144 = vld [vmem:[%s3 + $0xb8] sm:$0xff]
    %v145 = vld [vmem:[%s3 + $0xc0] sm:$0xff]
    %v146 = vld [vmem:[%s3 + $0xc8] sm:$0xff]
    %v147 = vld [vmem:[%s3 + $0xd0] sm:$0xff]
    %v148 = vld [vmem:[%s3 + $0xd8] sm:$0xff]
    %v149 = vld [vmem:[%s3 + $0xe0] sm:$0xff]
    %v150 = vld [vmem:[%s3 + $0xe8] sm:$0xff]
    %v151 = vld [vmem:[%s3 + $0xf0] sm:$0xff]
    %v152 = vld [vmem:[%s3 + $0xf8] sm:$0xff]
    %v153 = vld [vmem:[%s4] sm:$0x1]
    %v155 = vlaneseq
    %v156 = vshrl.u32 %v155, 7
    %v157 = vsub.s32 0, %v156
    %v158 = vrot.slane %v153, %v157
    %160 = vmatprep.subr.mxu0 0.0
    %161 = vmatpush1.msra.mxu0 %v121
    %162 = vmatprep.subr.mxu0 0.0
    %163 = vmatpush1.msra.mxu0 %v122
    %164 = vmatprep.subr.mxu0 0.0
    %165 = vmatpush1.msra.mxu0 %v123
    %166 = vmatprep.subr.mxu0 0.0
    %167 = vmatpush1.msra.mxu0 %v124
    %168 = vmatprep.subr.mxu0 0.0
    %169 = vmatpush1.msra.mxu0 %v125
    %170 = vmatprep.subr.mxu0 0.0
    %171 = vmatpush1.msra.mxu0 %v126
    %172 = vmatprep.subr.mxu0 0.0
    %173 = vmatpush1.msra.mxu0 %v127
    %174 = vmatprep.subr.mxu0 0.0
    %175 = vmatpush1.msra.mxu0 %v128
    %176 = vmatprep.subr.mxu0 0.0
    %177 = vmatpush1.msra.mxu0 %v129
    %178 = vmatprep.subr.mxu0 0.0
    %179 = vmatpush1.msra.mxu0 %v130
    %180 = vmatprep.subr.mxu0 0.0
    %181 = vmatpush1.msra.mxu0 %v131
    %182 = vmatprep.subr.mxu0 0.0
    %183 = vmatpush1.msra.mxu0 %v132
    %184 = vmatprep.subr.mxu0 0.0
    %185 = vmatpush1.msra.mxu0 %v133
    %186 = vmatprep.subr.mxu0 0.0
    %187 = vmatpush1.msra.mxu0 %v134
    %188 = vmatprep.subr.mxu0 0.0
    %189 = vmatpush1.msra.mxu0 %v135
    %190 = vmatprep.subr.mxu0 0.0
    %191 = vmatpush1.msra.mxu0 %v136
    %192 = vmatprep.subr.mxu0 0.0
    %193 = vmatpush1.msra.mxu0 %v137
    %194 = vmatprep.subr.mxu0 0.0
    %195 = vmatpush1.msra.mxu0 %v138
    %196 = vmatprep.subr.mxu0 0.0
    %197 = vmatpush1.msra.mxu0 %v139
    %198 = vmatprep.subr.mxu0 0.0
    %199 = vmatpush1.msra.mxu0 %v140
    %200 = vmatprep.subr.mxu0 0.0
    %201 = vmatpush1.msra.mxu0 %v141
    %202 = vmatprep.subr.mxu0 0.0
    %203 = vmatpush1.msra.mxu0 %v142
    %204 = vmatprep.subr.mxu0 0.0
    %205 = vmatpush1.msra.mxu0 %v143
    %206 = vmatprep.subr.mxu0 0.0
    %207 = vmatpush1.msra.mxu0 %v144
    %208 = vmatprep.subr.mxu0 0.0
    %209 = vmatpush1.msra.mxu0 %v145
    %210 = vmatprep.subr.mxu0 0.0
    %211 = vmatpush1.msra.mxu0 %v146
    %212 = vmatprep.subr.mxu0 0.0
    %213 = vmatpush1.msra.mxu0 %v147
    %214 = vmatprep.subr.mxu0 0.0
    %215 = vmatpush1.msra.mxu0 %v148
    %216 = vmatprep.subr.mxu0 0.0
    %217 = vmatpush1.msra.mxu0 %v149
    %218 = vmatprep.subr.mxu0 0.0
    %219 = vmatpush1.msra.mxu0 %v150
    %220 = vmatprep.subr.mxu0 0.0
    %221 = vmatpush1.msra.mxu0 %v151
    %222 = vmatprep.subr.mxu0 0.0
    %223 = vmatpush1.msra.mxu0 %v152
    %224 = vmatprep.mubr.f32.mxu0 %v120
    %225 = vmatmul.mubr.f32.gmra.mrb[0].mxu0 %v119
    %v226 = vpop.f32.mrb[0].mxu0
    %v227 = vadd.f32 %v158, %v226
    %v228 = vpop.f32.mrb[0].mxu0
    %229 = vdwg.mxu0
    %v230 = vmax.f32 %v227, 0.0
    %v231 = vld [vmem:[%s5] sm:$0xff]
    %v232 = vld [vmem:[%s5 + $0x8] sm:$0xff]
    %v233 = vld [vmem:[%s5 + $0x10] sm:$0xff]
    %v234 = vld [vmem:[%s5 + $0x18] sm:$0xff]
    %v235 = vld [vmem:[%s5 + $0x20] sm:$0xff]
    %v236 = vld [vmem:[%s5 + $0x28] sm:$0xff]
    %v237 = vld [vmem:[%s5 + $0x30] sm:$0xff]
    %v238 = vld [vmem:[%s5 + $0x38] sm:$0xff]
    %v239 = vld [vmem:[%s5 + $0x40] sm:$0xff]
    %v240 = vld [vmem:[%s5 + $0x48] sm:$0xff]
    %v241 = vld [vmem:[%s5 + $0x50] sm:$0xff]
    %v242 = vld [vmem:[%s5 + $0x58] sm:$0xff]
    %v243 = vld [vmem:[%s5 + $0x60] sm:$0xff]
    %v244 = vld [vmem:[%s5 + $0x68] sm:$0xff]
    %v245 = vld [vmem:[%s5 + $0x70] sm:$0xff]
    %v246 = vld [vmem:[%s5 + $0x78] sm:$0xff]
    %v247 = vld [vmem:[%s6] sm:$0x1]
    %v249 = vlaneseq
    %v250 = vshrl.u32 %v249, 7
    %v251 = vsub.s32 0, %v250
    %v252 = vrot.slane %v247, %v251
    %254 = vmatprep.subr.mxu0 0.0
    %255 = vmatpush1.msra.mxu0 %v231
    %256 = vmatprep.subr.mxu0 0.0
    %257 = vmatpush1.msra.mxu0 %v232
    %258 = vmatprep.subr.mxu0 0.0
    %259 = vmatpush1.msra.mxu0 %v233
    %260 = vmatprep.subr.mxu0 0.0
    %261 = vmatpush1.msra.mxu0 %v234
    %262 = vmatprep.subr.mxu0 0.0
    %263 = vmatpush1.msra.mxu0 %v235
    %264 = vmatprep.subr.mxu0 0.0
    %265 = vmatpush1.msra.mxu0 %v236
    %266 = vmatprep.subr.mxu0 0.0
    %267 = vmatpush1.msra.mxu0 %v237
    %268 = vmatprep.subr.mxu0 0.0
    %269 = vmatpush1.msra.mxu0 %v238
    %270 = vmatprep.subr.mxu0 0.0
    %271 = vmatpush1.msra.mxu0 %v239
    %272 = vmatprep.subr.mxu0 0.0
    %273 = vmatpush1.msra.mxu0 %v240
    %274 = vmatprep.subr.mxu0 0.0
    %275 = vmatpush1.msra.mxu0 %v241
    %276 = vmatprep.subr.mxu0 0.0
    %277 = vmatpush1.msra.mxu0 %v242
    %278 = vmatprep.subr.mxu0 0.0
    %279 = vmatpush1.msra.mxu0 %v243
    %280 = vmatprep.subr.mxu0 0.0
    %281 = vmatpush1.msra.mxu0 %v244
    %282 = vmatprep.subr.mxu0 0.0
    %283 = vmatpush1.msra.mxu0 %v245
    %284 = vmatprep.subr.mxu0 0.0
    %285 = vmatpush1.msra.mxu0 %v246
    %286 = vmatprep.subr.mxu0 0.0
    %287 = vmatpush1.msra.mxu0 0.0
    %288 = vmatprep.subr.mxu0 0.0
    %289 = vmatpush1.msra.mxu0 0.0
    %290 = vmatprep.subr.mxu0 0.0
    %291 = vmatpush1.msra.mxu0 0.0
    %292 = vmatprep.subr.mxu0 0.0
    %293 = vmatpush1.msra.mxu0 0.0
    %294 = vmatprep.subr.mxu0 0.0
    %295 = vmatpush1.msra.mxu0 0.0
    %296 = vmatprep.subr.mxu0 0.0
    %297 = vmatpush1.msra.mxu0 0.0
    %298 = vmatprep.subr.mxu0 0.0
    %299 = vmatpush1.msra.mxu0 0.0
    %300 = vmatprep.subr.mxu0 0.0
    %301 = vmatpush1.msra.mxu0 0.0
    %302 = vmatprep.subr.mxu0 0.0
    %303 = vmatpush1.msra.mxu0 0.0
    %304 = vmatprep.subr.mxu0 0.0
    %305 = vmatpush1.msra.mxu0 0.0
    %306 = vmatprep.subr.mxu0 0.0
    %307 = vmatpush1.msra.mxu0 0.0
    %308 = vmatprep.subr.mxu0 0.0
    %309 = vmatpush1.msra.mxu0 0.0
    %310 = vmatprep.subr.mxu0 0.0
    %311 = vmatpush1.msra.mxu0 0.0
    %312 = vmatprep.subr.mxu0 0.0
    %313 = vmatpush1.msra.mxu0 0.0
    %314 = vmatprep.subr.mxu0 0.0
    %315 = vmatpush1.msra.mxu0 0.0
    %316 = vmatprep.subr.mxu0 0.0
    %317 = vmatpush1.msra.mxu0 0.0
    %318 = vmatprep.mubr.f32.mxu0 0.0
    %319 = vmatmul.mubr.f32.gmra.mrb[0].mxu0 %v230
    %v320 = vpop.f32.mrb[0].mxu0
    %v321 = vadd.f32 %v252, %v320
    %v322 = vpop.f32.mrb[0].mxu0
    %323 = vdwg.mxu0
    %324 = vst [vmem:[#allocation2] sm:$0xff] %v321
    // Predicated region
    $region30: #{navmodel_forward.1} parent=1 // pred_check
      _
    $region31: #{navmodel_forward.1} parent=1 // pred_check_branch
      %326 = sbr.rel (0) target = $region33
    $region32: #{navmodel_forward.1} parent=1 // pred_region
      %s328 = ssub.s32 128, 128
      %329 = vsyncadd [#allocation3], %s328
      %s331 = sshll.u32 [#allocation2], 4
      %s332 = int_to_ptr.vmem [resolvable:$true] %s331
      %334 = dma.vmem_to_hbm [thread:$0]  %s332, 128, %s7, [#allocation3]
    $region33: #{navmodel_forward.1} parent=1 // pred_fallthru
      _
    // Predicated region
    $region34: #{navmodel_forward.1} parent=1 // pred_check
      _
    $region35: #{navmodel_forward.1} parent=1 // pred_check_branch
      %336 = sbr.rel (0) target = $region37
    $region36: #{navmodel_forward.1} parent=1 // pred_region
      %337 = dma.done [#allocation3], 128
    $region37: #{navmodel_forward.1} parent=1 // pred_fallthru
      _
    %338 = vsyncpa [#allocation3], 1

</llo_original>
